<compile_context>
chip_gen: v7x
topology: tpu7x:2x2x1
jax: 0.10.0
libtpu: 0.0.40
codegen_flags: <defaults>
</compile_context>

<pallas_src>
import functools

import jax
import jax.numpy as jnp
from jax import lax
from jax.experimental import pallas as pl
from jax.experimental.pallas import tpu as pltpu


def _inverted_residual_kernel(x_ref, w1_ref, b1_ref, wd_ref, bd_ref, w3_ref,
                              b3_ref, o_ref, *, width, cb):
    # x_ref: (1, C, H*W) for one batch element; lane dim = H*W (lane-dense).
    _, C, HW = x_ref.shape
    x2 = x_ref[0, cb:, :]                                   # branch-2 input half

    def pointwise(inp, w_ref, b_ref):
        # 1x1 conv with BN scale already folded into w; bias added here.
        if cb <= 16:
            # Tiny channel count: cb broadcast-FMAs on the VPU beat a <2%
            # utilized MXU pass.
            acc = jnp.zeros_like(inp)
            for cin in range(cb):
                acc = acc + w_ref[:, cin:cin + 1] * inp[cin:cin + 1, :]
        else:
            acc = jnp.dot(w_ref[...], inp, preferred_element_type=jnp.float32)
        return acc + b_ref[...]                             # b: (Cb, 1)

    # ---- 1x1 conv (+ folded BN) + ReLU -----------------------------------
    t = jnp.maximum(pointwise(x2, w1_ref, b1_ref), 0.0)

    # ---- depthwise 3x3, stride 1, pad 1 (+ folded BN, no ReLU) ------------
    # Computed directly in the flat (Cb, H*W) layout: 9 zero-filled lane
    # shifts.  Horizontal edge handling is done by pre-masking the SOURCE
    # (2 selects total instead of 6 per-tap selects):
    #   * ox = -1 taps must never read a source in the last column
    #   * ox = +1 taps must never read a source in the first column
    col = lax.broadcasted_iota(jnp.int32, (cb, HW), 1)
    if width & (width - 1) == 0:
        col = jnp.bitwise_and(col, width - 1)
    else:
        col = col % width
    src_for_ox = {
        -1: jnp.where(col < width - 1, t, 0.0),
        0: t,
        1: jnp.where(col > 0, t, 0.0),
    }

    def shift_flat(a, s):
        # out[:, p] = a[:, p + s] with zero fill outside [0, HW)
        if s == 0:
            return a
        if s > 0:
            return jnp.concatenate(
                [a[:, s:], jnp.zeros((cb, s), a.dtype)], axis=1)
        return jnp.concatenate(
            [jnp.zeros((cb, -s), a.dtype), a[:, :s]], axis=1)

    acc = jnp.zeros_like(t)
    for oy in (-1, 0, 1):
        for ox in (-1, 0, 1):
            tap = (oy + 1) * 3 + (ox + 1)
            sh = shift_flat(src_for_ox[ox], oy * width + ox)
            acc = acc + sh * wd_ref[:, tap:tap + 1]
    acc = acc + bd_ref[...]            # BN bias only; module has no ReLU here

    # ---- 1x1 conv (+ folded BN) + ReLU -----------------------------------
    z = jnp.maximum(pointwise(acc, w3_ref, b3_ref), 0.0)

    # ---- fused concat + channel_shuffle(groups=2) --------------------------
    # Output slab (Cb, 2*HW): group g lives at lane offset g*HW.  A contiguous
    # reshape of (B, Cb, 2*HW) -> (B, 2*Cb, H, W) puts channel 2*cpg+g exactly
    # where channel_shuffle(concat(x1, z), 2) would: g=0 -> identity half,
    # g=1 -> branch-2 half.  Both stores are lane-tile aligned (0 and HW=256).
    o_ref[0, :, :HW] = x_ref[0, :cb, :]
    o_ref[0, :, HW:] = z.astype(o_ref.dtype)


def inverted_residual_pallas(x_nchw, params):
    """Forward pass of InvertedResidual with stride=1 (inp == oup)."""
    B, C, H, W = x_nchw.shape
    Cb = C // 2
    HW = H * W

    # Flat-spatial view of NCHW is a free contiguous reshape.
    x_flat = x_nchw.reshape(B, C, HW)

    # Fold BN scales into the conv weights (once, outside the kernel).
    w1s = params["w1"] * params["s1"][:, None]              # (Cout, Cin)
    w3s = params["w3"] * params["s3"][:, None]
    wds = (params["wd"] * params["sd"][:, None, None]).reshape(Cb, 9)
    b1 = params["b1"][:, None]
    bd = params["bd"][:, None]
    b3 = params["b3"][:, None]

    kern = functools.partial(_inverted_residual_kernel, width=W, cb=Cb)
    full2 = lambda b: (0, 0)
    out = pl.pallas_call(
        kern,
        out_shape=jax.ShapeDtypeStruct((B, Cb, 2 * HW), jnp.float32),
        grid=(B,),
        in_specs=[
            pl.BlockSpec((1, C, HW), lambda b: (b, 0, 0)),    # full x slab
            pl.BlockSpec((Cb, Cb), full2),                    # w1 * s1
            pl.BlockSpec((Cb, 1), full2),                     # b1
            pl.BlockSpec((Cb, 9), full2),                     # wd * sd (flat taps)
            pl.BlockSpec((Cb, 1), full2),                     # bd
            pl.BlockSpec((Cb, Cb), full2),                    # w3 * s3
            pl.BlockSpec((Cb, 1), full2),                     # b3
        ],
        out_specs=pl.BlockSpec((1, Cb, 2 * HW), lambda b: (b, 0, 0)),
        compiler_params=pltpu.CompilerParams(
            dimension_semantics=("parallel",)),
    )(x_flat, w1s, b1, wds, bd, w3s, b3)

    # (B, Cb, 2*HW) -> (B, 2*Cb, H, W) is a free contiguous reshape and is
    # exactly the channel-shuffled concat.
    return out.reshape(B, C, H, W)


def inverted_residual_reference(x_nchw, params):
    """Pure-JAX reference (lax conv) mirroring the PyTorch module (eval BN)."""
    B, C, H, W = x_nchw.shape
    Cb = C // 2
    x1, x2 = jnp.split(x_nchw, 2, axis=1)

    def pw(x, w):   # 1x1 conv, w is (Cout, Cin)
        return lax.conv_general_dilated(
            x, w[:, :, None, None], (1, 1), "VALID",
            dimension_numbers=("NCHW", "OIHW", "NCHW"))

    def bn(x, s, b):
        return x * s[None, :, None, None] + b[None, :, None, None]

    y = jax.nn.relu(bn(pw(x2, params["w1"]), params["s1"], params["b1"]))
    wd_oihw = params["wd"][:, None, :, :]                    # (Cb, 1, 3, 3)
    y = lax.conv_general_dilated(
        y, wd_oihw, (1, 1), ((1, 1), (1, 1)),
        feature_group_count=Cb,
        dimension_numbers=("NCHW", "OIHW", "NCHW"))
    y = bn(y, params["sd"], params["bd"])
    z = jax.nn.relu(bn(pw(y, params["w3"]), params["s3"], params["b3"]))

    out = jnp.concatenate([x1, z], axis=1)
    out = out.reshape(B, 2, Cb, H, W).transpose(0, 2, 1, 3, 4).reshape(B, C, H, W)
    return out


def make_params(key, cb):
    """Deterministic parameters; BN folded into per-channel scale/bias."""
    ks = jax.random.split(key, 15)
    eps = 1e-5

    def fold_bn(kg, kb, km, kv):
        gamma = 1.0 + 0.1 * jax.random.normal(kg, (cb,), jnp.float32)
        beta = 0.1 * jax.random.normal(kb, (cb,), jnp.float32)
        mean = 0.1 * jax.random.normal(km, (cb,), jnp.float32)
        var = 0.5 + jax.random.uniform(kv, (cb,), jnp.float32)
        scale = gamma * lax.rsqrt(var + eps)
        bias = beta - mean * scale
        return scale, bias

    w1 = 0.2 * jax.random.normal(ks[0], (cb, cb), jnp.float32)     # (Cout, Cin)
    wd = 0.2 * jax.random.normal(ks[1], (cb, 3, 3), jnp.float32)   # depthwise
    w3 = 0.2 * jax.random.normal(ks[2], (cb, cb), jnp.float32)
    s1, b1 = fold_bn(ks[3], ks[4], ks[5], ks[6])
    sd, bd = fold_bn(ks[7], ks[8], ks[9], ks[10])
    s3, b3 = fold_bn(ks[11], ks[12], ks[13], ks[14])
    return dict(w1=w1, s1=s1, b1=b1, wd=wd, sd=sd, bd=bd,
                w3=w3, s3=s3, b3=b3)


if __name__ == "__main__":
    # stride=1 => inp == oup == 2 * branch_features
    B, C, H, W = 2, 8, 16, 16
    key = jax.random.PRNGKey(0)
    kx, kp = jax.random.split(key)
    x = jax.random.normal(kx, (B, C, H, W), jnp.float32)
    params = make_params(kp, C // 2)

    out = jax.block_until_ready(inverted_residual_pallas(x, params))
    ref = jax.block_until_ready(inverted_residual_reference(x, params))

    assert out.shape == (B, C, H, W)
    assert jnp.max(jnp.abs(out - ref)) < 1e-4, "mismatch vs reference"
    print("KERNEL_OK")
</pallas_src>

<mosaic_0001>
module attributes {stable_mosaic.version = 11 : i64} {
  func.func @_inverted_residual_kernel(%arg0: i32, %arg1: memref<1x8x256xf32, #tpu.memory_space<vmem>>, %arg2: memref<4x4xf32, #tpu.memory_space<vmem>>, %arg3: memref<4x1xf32, #tpu.memory_space<vmem>>, %arg4: memref<4x9xf32, #tpu.memory_space<vmem>>, %arg5: memref<4x1xf32, #tpu.memory_space<vmem>>, %arg6: memref<4x4xf32, #tpu.memory_space<vmem>>, %arg7: memref<4x1xf32, #tpu.memory_space<vmem>>, %arg8: memref<1x4x512xf32, #tpu.memory_space<vmem>>) attributes {dimension_semantics = [#tpu.dimension_semantics<parallel>], iteration_bounds = array<i64: 2>, scalar_prefetch = 0 : i64, scratch_operands = 0 : i64, tpu.core_type = #tpu.core_type<tc>, window_params = [{transform_indices = @transform_0, window_bounds = array<i64: 1, 8, 256>}, {pipeline_mode = #tpu.pipeline_mode<synchronous>, transform_indices = @transform_1, window_bounds = array<i64: 4, 4>}, {pipeline_mode = #tpu.pipeline_mode<synchronous>, transform_indices = @transform_2, window_bounds = array<i64: 4, 1>}, {pipeline_mode = #tpu.pipeline_mode<synchronous>, transform_indices = @transform_3, window_bounds = array<i64: 4, 9>}, {pipeline_mode = #tpu.pipeline_mode<synchronous>, transform_indices = @transform_4, window_bounds = array<i64: 4, 1>}, {pipeline_mode = #tpu.pipeline_mode<synchronous>, transform_indices = @transform_5, window_bounds = array<i64: 4, 4>}, {pipeline_mode = #tpu.pipeline_mode<synchronous>, transform_indices = @transform_6, window_bounds = array<i64: 4, 1>}, {transform_indices = @transform_7, window_bounds = array<i64: 1, 4, 512>}]} {
    %c0 = arith.constant 0 : index
    %c4 = arith.constant 4 : index
    %c0_0 = arith.constant 0 : index
    %0 = vector.load %arg1[%c0, %c4, %c0_0] : memref<1x8x256xf32, #tpu.memory_space<vmem>>, vector<1x4x256xf32>
    %1 = vector.shape_cast %0 : vector<1x4x256xf32> to vector<4x256xf32>
    %cst = arith.constant 0.000000e+00 : f32
    %2 = vector.broadcast %cst : f32 to vector<4x256xf32>
    %c0_1 = arith.constant 0 : index
    %c0_2 = arith.constant 0 : index
    %3 = vector.load %arg2[%c0_1, %c0_2] : memref<4x4xf32, #tpu.memory_space<vmem>>, vector<4x1xf32>
    %4 = vector.extract_strided_slice %1 {offsets = [0, 0], sizes = [1, 256], strides = [1, 1]} : vector<4x256xf32> to vector<1x256xf32>
    %5 = vector.broadcast %3 : vector<4x1xf32> to vector<4x256xf32>
    %6 = vector.broadcast %4 : vector<1x256xf32> to vector<4x256xf32>
    %7 = arith.mulf %5, %6 : vector<4x256xf32>
    %8 = arith.addf %2, %7 : vector<4x256xf32>
    %c0_3 = arith.constant 0 : index
    %c1 = arith.constant 1 : index
    %9 = vector.load %arg2[%c0_3, %c1] : memref<4x4xf32, #tpu.memory_space<vmem>>, vector<4x1xf32>
    %10 = vector.extract_strided_slice %1 {offsets = [1, 0], sizes = [1, 256], strides = [1, 1]} : vector<4x256xf32> to vector<1x256xf32>
    %11 = vector.broadcast %9 : vector<4x1xf32> to vector<4x256xf32>
    %12 = vector.broadcast %10 : vector<1x256xf32> to vector<4x256xf32>
    %13 = arith.mulf %11, %12 : vector<4x256xf32>
    %14 = arith.addf %8, %13 : vector<4x256xf32>
    %c0_4 = arith.constant 0 : index
    %c2 = arith.constant 2 : index
    %15 = vector.load %arg2[%c0_4, %c2] : memref<4x4xf32, #tpu.memory_space<vmem>>, vector<4x1xf32>
    %16 = vector.extract_strided_slice %1 {offsets = [2, 0], sizes = [1, 256], strides = [1, 1]} : vector<4x256xf32> to vector<1x256xf32>
    %17 = vector.broadcast %15 : vector<4x1xf32> to vector<4x256xf32>
    %18 = vector.broadcast %16 : vector<1x256xf32> to vector<4x256xf32>
    %19 = arith.mulf %17, %18 : vector<4x256xf32>
    %20 = arith.addf %14, %19 : vector<4x256xf32>
    %c0_5 = arith.constant 0 : index
    %c3 = arith.constant 3 : index
    %21 = vector.load %arg2[%c0_5, %c3] : memref<4x4xf32, #tpu.memory_space<vmem>>, vector<4x1xf32>
    %22 = vector.extract_strided_slice %1 {offsets = [3, 0], sizes = [1, 256], strides = [1, 1]} : vector<4x256xf32> to vector<1x256xf32>
    %23 = vector.broadcast %21 : vector<4x1xf32> to vector<4x256xf32>
    %24 = vector.broadcast %22 : vector<1x256xf32> to vector<4x256xf32>
    %25 = arith.mulf %23, %24 : vector<4x256xf32>
    %26 = arith.addf %20, %25 : vector<4x256xf32>
    %c0_6 = arith.constant 0 : index
    %c0_7 = arith.constant 0 : index
    %27 = vector.load %arg3[%c0_6, %c0_7] : memref<4x1xf32, #tpu.memory_space<vmem>>, vector<4x1xf32>
    %28 = vector.broadcast %27 : vector<4x1xf32> to vector<4x256xf32>
    %29 = arith.addf %26, %28 : vector<4x256xf32>
    %cst_8 = arith.constant 0.000000e+00 : f32
    %30 = vector.broadcast %cst_8 : f32 to vector<4x256xf32>
    %31 = arith.maximumf %29, %30 : vector<4x256xf32>
    %32 = tpu.iota {dimensions = array<i32: 1>} : vector<4x256xi32>
    %c15_i32 = arith.constant 15 : i32
    %33 = vector.broadcast %c15_i32 : i32 to vector<4x256xi32>
    %34 = arith.andi %32, %33 : vector<4x256xi32>
    %c15_i32_9 = arith.constant 15 : i32
    %35 = vector.broadcast %c15_i32_9 : i32 to vector<4x256xi32>
    %36 = arith.cmpi slt, %34, %35 : vector<4x256xi32>
    %cst_10 = arith.constant 0.000000e+00 : f32
    %37 = vector.broadcast %cst_10 : f32 to vector<4x256xf32>
    %38 = arith.select %36, %31, %37 : vector<4x256xi1>, vector<4x256xf32>
    %c0_i32 = arith.constant 0 : i32
    %39 = vector.broadcast %c0_i32 : i32 to vector<4x256xi32>
    %40 = arith.cmpi sgt, %34, %39 : vector<4x256xi32>
    %cst_11 = arith.constant 0.000000e+00 : f32
    %41 = vector.broadcast %cst_11 : f32 to vector<4x256xf32>
    %42 = arith.select %40, %31, %41 : vector<4x256xi1>, vector<4x256xf32>
    %cst_12 = arith.constant 0.000000e+00 : f32
    %43 = vector.broadcast %cst_12 : f32 to vector<4x256xf32>
    %cst_13 = arith.constant 0.000000e+00 : f32
    %44 = vector.broadcast %cst_13 : f32 to vector<4x17xf32>
    %45 = vector.extract_strided_slice %38 {offsets = [0, 0], sizes = [4, 239], strides = [1, 1]} : vector<4x256xf32> to vector<4x239xf32>
    %46 = tpu.concatenate %44, %45 in 1 : vector<4x17xf32>, vector<4x239xf32> -> vector<4x256xf32>
    %c0_14 = arith.constant 0 : index
    %c0_15 = arith.constant 0 : index
    %47 = vector.load %arg4[%c0_14, %c0_15] : memref<4x9xf32, #tpu.memory_space<vmem>>, vector<4x1xf32>
    %48 = vector.broadcast %47 : vector<4x1xf32> to vector<4x256xf32>
    %49 = arith.mulf %46, %48 : vector<4x256xf32>
    %50 = arith.addf %43, %49 : vector<4x256xf32>
    %cst_16 = arith.constant 0.000000e+00 : f32
    %51 = vector.broadcast %cst_16 : f32 to vector<4x16xf32>
    %52 = vector.extract_strided_slice %31 {offsets = [0, 0], sizes = [4, 240], strides = [1, 1]} : vector<4x256xf32> to vector<4x240xf32>
    %53 = tpu.concatenate %51, %52 in 1 : vector<4x16xf32>, vector<4x240xf32> -> vector<4x256xf32>
    %c0_17 = arith.constant 0 : index
    %c1_18 = arith.constant 1 : index
    %54 = vector.load %arg4[%c0_17, %c1_18] : memref<4x9xf32, #tpu.memory_space<vmem>>, vector<4x1xf32>
    %55 = vector.broadcast %54 : vector<4x1xf32> to vector<4x256xf32>
    %56 = arith.mulf %53, %55 : vector<4x256xf32>
    %57 = arith.addf %50, %56 : vector<4x256xf32>
    %cst_19 = arith.constant 0.000000e+00 : f32
    %58 = vector.broadcast %cst_19 : f32 to vector<4x15xf32>
    %59 = vector.extract_strided_slice %42 {offsets = [0, 0], sizes = [4, 241], strides = [1, 1]} : vector<4x256xf32> to vector<4x241xf32>
    %60 = tpu.concatenate %58, %59 in 1 : vector<4x15xf32>, vector<4x241xf32> -> vector<4x256xf32>
    %c0_20 = arith.constant 0 : index
    %c2_21 = arith.constant 2 : index
    %61 = vector.load %arg4[%c0_20, %c2_21] : memref<4x9xf32, #tpu.memory_space<vmem>>, vector<4x1xf32>
    %62 = vector.broadcast %61 : vector<4x1xf32> to vector<4x256xf32>
    %63 = arith.mulf %60, %62 : vector<4x256xf32>
    %64 = arith.addf %57, %63 : vector<4x256xf32>
    %cst_22 = arith.constant 0.000000e+00 : f32
    %65 = vector.broadcast %cst_22 : f32 to vector<4x1xf32>
    %66 = vector.extract_strided_slice %38 {offsets = [0, 0], sizes = [4, 255], strides = [1, 1]} : vector<4x256xf32> to vector<4x255xf32>
    %67 = tpu.concatenate %65, %66 in 1 : vector<4x1xf32>, vector<4x255xf32> -> vector<4x256xf32>
    %c0_23 = arith.constant 0 : index
    %c3_24 = arith.constant 3 : index
    %68 = vector.load %arg4[%c0_23, %c3_24] : memref<4x9xf32, #tpu.memory_space<vmem>>, vector<4x1xf32>
    %69 = vector.broadcast %68 : vector<4x1xf32> to vector<4x256xf32>
    %70 = arith.mulf %67, %69 : vector<4x256xf32>
    %71 = arith.addf %64, %70 : vector<4x256xf32>
    %c0_25 = arith.constant 0 : index
    %c4_26 = arith.constant 4 : index
    %72 = vector.load %arg4[%c0_25, %c4_26] : memref<4x9xf32, #tpu.memory_space<vmem>>, vector<4x1xf32>
    %73 = vector.broadcast %72 : vector<4x1xf32> to vector<4x256xf32>
    %74 = arith.mulf %31, %73 : vector<4x256xf32>
    %75 = arith.addf %71, %74 : vector<4x256xf32>
    %76 = vector.extract_strided_slice %42 {offsets = [0, 1], sizes = [4, 255], strides = [1, 1]} : vector<4x256xf32> to vector<4x255xf32>
    %cst_27 = arith.constant 0.000000e+00 : f32
    %77 = vector.broadcast %cst_27 : f32 to vector<4x1xf32>
    %78 = tpu.concatenate %76, %77 in 1 : vector<4x255xf32>, vector<4x1xf32> -> vector<4x256xf32>
    %c0_28 = arith.constant 0 : index
    %c5 = arith.constant 5 : index
    %79 = vector.load %arg4[%c0_28, %c5] : memref<4x9xf32, #tpu.memory_space<vmem>>, vector<4x1xf32>
    %80 = vector.broadcast %79 : vector<4x1xf32> to vector<4x256xf32>
    %81 = arith.mulf %78, %80 : vector<4x256xf32>
    %82 = arith.addf %75, %81 : vector<4x256xf32>
    %83 = vector.extract_strided_slice %38 {offsets = [0, 15], sizes = [4, 241], strides = [1, 1]} : vector<4x256xf32> to vector<4x241xf32>
    %cst_29 = arith.constant 0.000000e+00 : f32
    %84 = vector.broadcast %cst_29 : f32 to vector<4x15xf32>
    %85 = tpu.concatenate %83, %84 in 1 : vector<4x241xf32>, vector<4x15xf32> -> vector<4x256xf32>
    %c0_30 = arith.constant 0 : index
    %c6 = arith.constant 6 : index
    %86 = vector.load %arg4[%c0_30, %c6] : memref<4x9xf32, #tpu.memory_space<vmem>>, vector<4x1xf32>
    %87 = vector.broadcast %86 : vector<4x1xf32> to vector<4x256xf32>
    %88 = arith.mulf %85, %87 : vector<4x256xf32>
    %89 = arith.addf %82, %88 : vector<4x256xf32>
    %90 = vector.extract_strided_slice %31 {offsets = [0, 16], sizes = [4, 240], strides = [1, 1]} : vector<4x256xf32> to vector<4x240xf32>
    %cst_31 = arith.constant 0.000000e+00 : f32
    %91 = vector.broadcast %cst_31 : f32 to vector<4x16xf32>
    %92 = tpu.concatenate %90, %91 in 1 : vector<4x240xf32>, vector<4x16xf32> -> vector<4x256xf32>
    %c0_32 = arith.constant 0 : index
    %c7 = arith.constant 7 : index
    %93 = vector.load %arg4[%c0_32, %c7] : memref<4x9xf32, #tpu.memory_space<vmem>>, vector<4x1xf32>
    %94 = vector.broadcast %93 : vector<4x1xf32> to vector<4x256xf32>
    %95 = arith.mulf %92, %94 : vector<4x256xf32>
    %96 = arith.addf %89, %95 : vector<4x256xf32>
    %97 = vector.extract_strided_slice %42 {offsets = [0, 17], sizes = [4, 239], strides = [1, 1]} : vector<4x256xf32> to vector<4x239xf32>
    %cst_33 = arith.constant 0.000000e+00 : f32
    %98 = vector.broadcast %cst_33 : f32 to vector<4x17xf32>
    %99 = tpu.concatenate %97, %98 in 1 : vector<4x239xf32>, vector<4x17xf32> -> vector<4x256xf32>
    %c0_34 = arith.constant 0 : index
    %c8 = arith.constant 8 : index
    %100 = vector.load %arg4[%c0_34, %c8] : memref<4x9xf32, #tpu.memory_space<vmem>>, vector<4x1xf32>
    %101 = vector.broadcast %100 : vector<4x1xf32> to vector<4x256xf32>
    %102 = arith.mulf %99, %101 : vector<4x256xf32>
    %103 = arith.addf %96, %102 : vector<4x256xf32>
    %c0_35 = arith.constant 0 : index
    %c0_36 = arith.constant 0 : index
    %104 = vector.load %arg5[%c0_35, %c0_36] : memref<4x1xf32, #tpu.memory_space<vmem>>, vector<4x1xf32>
    %105 = vector.broadcast %104 : vector<4x1xf32> to vector<4x256xf32>
    %106 = arith.addf %103, %105 : vector<4x256xf32>
    %cst_37 = arith.constant 0.000000e+00 : f32
    %107 = vector.broadcast %cst_37 : f32 to vector<4x256xf32>
    %c0_38 = arith.constant 0 : index
    %c0_39 = arith.constant 0 : index
    %108 = vector.load %arg6[%c0_38, %c0_39] : memref<4x4xf32, #tpu.memory_space<vmem>>, vector<4x1xf32>
    %109 = vector.extract_strided_slice %106 {offsets = [0, 0], sizes = [1, 256], strides = [1, 1]} : vector<4x256xf32> to vector<1x256xf32>
    %110 = vector.broadcast %108 : vector<4x1xf32> to vector<4x256xf32>
    %111 = vector.broadcast %109 : vector<1x256xf32> to vector<4x256xf32>
    %112 = arith.mulf %110, %111 : vector<4x256xf32>
    %113 = arith.addf %107, %112 : vector<4x256xf32>
    %c0_40 = arith.constant 0 : index
    %c1_41 = arith.constant 1 : index
    %114 = vector.load %arg6[%c0_40, %c1_41] : memref<4x4xf32, #tpu.memory_space<vmem>>, vector<4x1xf32>
    %115 = vector.extract_strided_slice %106 {offsets = [1, 0], sizes = [1, 256], strides = [1, 1]} : vector<4x256xf32> to vector<1x256xf32>
    %116 = vector.broadcast %114 : vector<4x1xf32> to vector<4x256xf32>
    %117 = vector.broadcast %115 : vector<1x256xf32> to vector<4x256xf32>
    %118 = arith.mulf %116, %117 : vector<4x256xf32>
    %119 = arith.addf %113, %118 : vector<4x256xf32>
    %c0_42 = arith.constant 0 : index
    %c2_43 = arith.constant 2 : index
    %120 = vector.load %arg6[%c0_42, %c2_43] : memref<4x4xf32, #tpu.memory_space<vmem>>, vector<4x1xf32>
    %121 = vector.extract_strided_slice %106 {offsets = [2, 0], sizes = [1, 256], strides = [1, 1]} : vector<4x256xf32> to vector<1x256xf32>
    %122 = vector.broadcast %120 : vector<4x1xf32> to vector<4x256xf32>
    %123 = vector.broadcast %121 : vector<1x256xf32> to vector<4x256xf32>
    %124 = arith.mulf %122, %123 : vector<4x256xf32>
    %125 = arith.addf %119, %124 : vector<4x256xf32>
    %c0_44 = arith.constant 0 : index
    %c3_45 = arith.constant 3 : index
    %126 = vector.load %arg6[%c0_44, %c3_45] : memref<4x4xf32, #tpu.memory_space<vmem>>, vector<4x1xf32>
    %127 = vector.extract_strided_slice %106 {offsets = [3, 0], sizes = [1, 256], strides = [1, 1]} : vector<4x256xf32> to vector<1x256xf32>
    %128 = vector.broadcast %126 : vector<4x1xf32> to vector<4x256xf32>
    %129 = vector.broadcast %127 : vector<1x256xf32> to vector<4x256xf32>
    %130 = arith.mulf %128, %129 : vector<4x256xf32>
    %131 = arith.addf %125, %130 : vector<4x256xf32>
    %c0_46 = arith.constant 0 : index
    %c0_47 = arith.constant 0 : index
    %132 = vector.load %arg7[%c0_46, %c0_47] : memref<4x1xf32, #tpu.memory_space<vmem>>, vector<4x1xf32>
    %133 = vector.broadcast %132 : vector<4x1xf32> to vector<4x256xf32>
    %134 = arith.addf %131, %133 : vector<4x256xf32>
    %cst_48 = arith.constant 0.000000e+00 : f32
    %135 = vector.broadcast %cst_48 : f32 to vector<4x256xf32>
    %136 = arith.maximumf %134, %135 : vector<4x256xf32>
    %c0_49 = arith.constant 0 : index
    %c0_50 = arith.constant 0 : index
    %c0_51 = arith.constant 0 : index
    %137 = vector.load %arg1[%c0_49, %c0_50, %c0_51] : memref<1x8x256xf32, #tpu.memory_space<vmem>>, vector<1x4x256xf32>
    %138 = vector.shape_cast %137 : vector<1x4x256xf32> to vector<4x256xf32>
    %c0_52 = arith.constant 0 : index
    %c0_53 = arith.constant 0 : index
    %c0_54 = arith.constant 0 : index
    %139 = vector.load %arg8[%c0_52, %c0_53, %c0_54] : memref<1x4x512xf32, #tpu.memory_space<vmem>>, vector<1x4x256xf32>
    %140 = vector.shape_cast %139 : vector<1x4x256xf32> to vector<4x256xf32>
    %141 = vector.shape_cast %138 : vector<4x256xf32> to vector<1x4x256xf32>
    tpu.vector_store %arg8[%c0_52, %c0_53, %c0_54], %141 {strides = array<i32>} : memref<1x4x512xf32, #tpu.memory_space<vmem>>, vector<1x4x256xf32>,
    %c0_55 = arith.constant 0 : index
    %c0_56 = arith.constant 0 : index
    %c256 = arith.constant 256 : index
    %142 = vector.load %arg8[%c0_55, %c0_56, %c256] : memref<1x4x512xf32, #tpu.memory_space<vmem>>, vector<1x4x256xf32>
    %143 = vector.shape_cast %142 : vector<1x4x256xf32> to vector<4x256xf32>
    %144 = vector.shape_cast %136 : vector<4x256xf32> to vector<1x4x256xf32>
    tpu.vector_store %arg8[%c0_55, %c0_56, %c256], %144 {strides = array<i32>} : memref<1x4x512xf32, #tpu.memory_space<vmem>>, vector<1x4x256xf32>,
    return
  }
  func.func @transform_0(%arg0: i32) -> (i32, i32, i32) {
    %c0_i32 = arith.constant 0 : i32
    %c0_i32_0 = arith.constant 0 : i32
    %c0_i32_1 = arith.constant 0 : i32
    return %arg0, %c0_i32, %c0_i32_0 : i32, i32, i32
  }
  func.func @transform_1(%arg0: i32) -> (i32, i32) {
    %c0_i32 = arith.constant 0 : i32
    %c0_i32_0 = arith.constant 0 : i32
    %c0_i32_1 = arith.constant 0 : i32
    return %c0_i32, %c0_i32_0 : i32, i32
  }
  func.func @transform_2(%arg0: i32) -> (i32, i32) {
    %c0_i32 = arith.constant 0 : i32
    %c0_i32_0 = arith.constant 0 : i32
    %c0_i32_1 = arith.constant 0 : i32
    return %c0_i32, %c0_i32_0 : i32, i32
  }
  func.func @transform_3(%arg0: i32) -> (i32, i32) {
    %c0_i32 = arith.constant 0 : i32
    %c0_i32_0 = arith.constant 0 : i32
    %c0_i32_1 = arith.constant 0 : i32
    return %c0_i32, %c0_i32_0 : i32, i32
  }
  func.func @transform_4(%arg0: i32) -> (i32, i32) {
    %c0_i32 = arith.constant 0 : i32
    %c0_i32_0 = arith.constant 0 : i32
    %c0_i32_1 = arith.constant 0 : i32
    return %c0_i32, %c0_i32_0 : i32, i32
  }
  func.func @transform_5(%arg0: i32) -> (i32, i32) {
    %c0_i32 = arith.constant 0 : i32
    %c0_i32_0 = arith.constant 0 : i32
    %c0_i32_1 = arith.constant 0 : i32
    return %c0_i32, %c0_i32_0 : i32, i32
  }
  func.func @transform_6(%arg0: i32) -> (i32, i32) {
    %c0_i32 = arith.constant 0 : i32
    %c0_i32_0 = arith.constant 0 : i32
    %c0_i32_1 = arith.constant 0 : i32
    return %c0_i32, %c0_i32_0 : i32, i32
  }
  func.func @transform_7(%arg0: i32) -> (i32, i32, i32) {
    %c0_i32 = arith.constant 0 : i32
    %c0_i32_0 = arith.constant 0 : i32
    %c0_i32_1 = arith.constant 0 : i32
    return %arg0, %c0_i32, %c0_i32_0 : i32, i32, i32
  }
}

</mosaic_0001>

<llo_original>
// kernel: tpu_custom_call.1
$region0: #{tpu_custom_call.1}
  #allocation0 [shape = 'u32[]', space=smem, size = 0x4, offset = 0x4, fixed_abs, tag = 'smem constant byte address 0x4 - core index']
  #allocation1 [shape = 'u32[144,128]{1,0:T(1,128)}', space=vmem, size = 0x12000, scoped, tag = 'internal scratch']
  %s0 = inlined_call_operand.hbm [shape: f32[2,8,256], index: 0, kind: input, shape index: {}]
  %s1 = inlined_call_operand.vmem [shape: f32[4,4], index: 1, kind: input, shape index: {}]
  %s2 = inlined_call_operand.vmem [shape: f32[4,1], index: 2, kind: input, shape index: {}]
  %s3 = inlined_call_operand.vmem [shape: f32[4,9], index: 3, kind: input, shape index: {}]
  %s4 = inlined_call_operand.vmem [shape: f32[4,1], index: 4, kind: input, shape index: {}]
  %s5 = inlined_call_operand.vmem [shape: f32[4,4], index: 5, kind: input, shape index: {}]
  %s6 = inlined_call_operand.vmem [shape: f32[4,1], index: 6, kind: input, shape index: {}]
  %s7 = inlined_call_operand.hbm [shape: f32[2,4,512], index: 7, kind: output, shape index: {}]
  %s8 = sld [smem:[#allocation0]]
  $region65: #{tpu_custom_call.1} parent=0
    _
  %s10 = ssub.s32 1, %s8
  %s11 = scalar_select 0, %s10, %s8
  $region1: #{tpu_custom_call.1} parent=0
    #allocation2 [shape = 'u8[16384]{0}', space=vmem, size = 0x4000, scoped, tag = 'input window, operand 0']
    #allocation3 [shape = 's32[2]{0}', space=sflag, size = 0x8, scoped, tag = 'scoped memory for tpu_custom_call.1']
    #allocation4 [shape = 's32[2]{0}', space=sflag, size = 0x8, scoped, tag = 'scoped memory for tpu_custom_call.1']
    #allocation5 [shape = 'u8[16384]{0}', space=vmem, size = 0x4000, scoped, tag = 'output window, operand 0']
    %12 = vsyncpa [#allocation3], 0
    %s13 = scalar_lea.sflag [#allocation3], 1
    %14 = vsyncpa %s13, 0
    %15 = vsyncpa [#allocation4], 0
    %s16 = scalar_lea.sflag [#allocation4], 1
    %17 = vsyncpa %s16, 0
    loop: start=0, step=1, limit=4
    $region2: #{tpu_custom_call.1} parent=1 // loop_pre_header
      _
    $region3: #{tpu_custom_call.1} parent=1 // loop_header
      %s19 = sphi 0, %s23
      %p20 = scmp.ge.s32.totalorder %s19, 4
      %s29 = sphi 0, %s31
      %s32 = sphi 0, %s29
      %s33 = sphi 0, %s32
      %s49 = sphi 0, %s33
      %s53 = sphi 0, %s53
      %s55 = sphi 0, %s53
      %s56 = sphi 0, %s55
      %s70 = sphi 0, %s56
      %s74 = sphi 0, %s74
      %s76 = sphi 0, %s74
      %s77 = sphi 0, %s76
      %s91 = sphi 0, %s77
      %s95 = sphi 0, %s95
      %s97 = sphi 0, %s95
      %s98 = sphi 0, %s97
      %s112 = sphi 0, %s98
      %s116 = sphi 0, %s116
      %s118 = sphi 0, %s116
      %s119 = sphi 0, %s118
      %s133 = sphi 0, %s119
      %s137 = sphi 0, %s137
      %s139 = sphi 0, %s137
      %s140 = sphi 0, %s139
      %s154 = sphi 0, %s140
      %s158 = sphi 0, %s158
      %s160 = sphi 0, %s158
      %s161 = sphi 0, %s160
      %s175 = sphi 0, %s161
      %s181 = sphi 0, %s183
      %s184 = sphi 0, %s181
      %s185 = sphi 0, %s184
      %s201 = sphi 0, %s185
    $region4: #{tpu_custom_call.1} parent=1 // loop_header_branch
      %22 = sbr.rel (%p20) target = $region8
    $region5: #{tpu_custom_call.1} parent=1 // loop_body
      %s24 = ssub.s32 %s19, 1
      %s25 = ssub.s32 %s19, 2
      %s26 = sadd.s32 %s19, 1
      %s27 = ssub.s32 %s19, %s26
      %p28 = scmp.eq.s32.totalorder %s27, 0
      %s30 = sadd.s32 %s29, 1
      %s31 = scalar_select %p28, %s29, %s30
      %p34 = pneg %p28
      %p35 = scmp.eq.s32.totalorder %s19, 1
      %p36 = por %p34, %p35
      %p37 = scmp.ne.s32.totalorder %s29, %s32
      %p38 = scmp.eq.s32.totalorder %s19, 0
      %p39 = por %p37, %p38
      %p40 = scmp.ne.s32.totalorder %s29, %s32
      %p41 = scmp.eq.s32.totalorder %s24, 1
      %p42 = por %p40, %p41
      %p43 = scmp.ne.s32.totalorder %s32, %s33
      %p44 = scmp.eq.s32.totalorder %s24, 0
      %p45 = por %p43, %p44
      %p46 = scmp.ne.s32.totalorder %s32, %s33
      %p47 = scmp.eq.s32.totalorder %s25, 1
      %p48 = por %p46, %p47
      %p50 = scmp.ne.s32.totalorder %s33, %s49
      %p51 = scmp.eq.s32.totalorder %s25, 0
      %p52 = por %p50, %p51
      %s54 = sadd.s32 %s53, 1
      %p57 = scmp.eq.s32.totalorder %s19, 1
      %p58 = scmp.ne.s32.totalorder %s53, %s55
      %p59 = scmp.eq.s32.totalorder %s19, 0
      %p60 = por %p58, %p59
      %p61 = scmp.ne.s32.totalorder %s53, %s55
      %p62 = scmp.eq.s32.totalorder %s24, 1
      %p63 = por %p61, %p62
      %p64 = scmp.ne.s32.totalorder %s55, %s56
      %p65 = scmp.eq.s32.totalorder %s24, 0
      %p66 = por %p64, %p65
      %p67 = scmp.ne.s32.totalorder %s55, %s56
      %p68 = scmp.eq.s32.totalorder %s25, 1
      %p69 = por %p67, %p68
      %p71 = scmp.ne.s32.totalorder %s56, %s70
      %p72 = scmp.eq.s32.totalorder %s25, 0
      %p73 = por %p71, %p72
      %s75 = sadd.s32 %s74, 1
      %p78 = scmp.eq.s32.totalorder %s19, 1
      %p79 = scmp.ne.s32.totalorder %s74, %s76
      %p80 = scmp.eq.s32.totalorder %s19, 0
      %p81 = por %p79, %p80
      %p82 = scmp.ne.s32.totalorder %s74, %s76
      %p83 = scmp.eq.s32.totalorder %s24, 1
      %p84 = por %p82, %p83
      %p85 = scmp.ne.s32.totalorder %s76, %s77
      %p86 = scmp.eq.s32.totalorder %s24, 0
      %p87 = por %p85, %p86
      %p88 = scmp.ne.s32.totalorder %s76, %s77
      %p89 = scmp.eq.s32.totalorder %s25, 1
      %p90 = por %p88, %p89
      %p92 = scmp.ne.s32.totalorder %s77, %s91
      %p93 = scmp.eq.s32.totalorder %s25, 0
      %p94 = por %p92, %p93
      %s96 = sadd.s32 %s95, 1
      %p99 = scmp.eq.s32.totalorder %s19, 1
      %p100 = scmp.ne.s32.totalorder %s95, %s97
      %p101 = scmp.eq.s32.totalorder %s19, 0
      %p102 = por %p100, %p101
      %p103 = scmp.ne.s32.totalorder %s95, %s97
      %p104 = scmp.eq.s32.totalorder %s24, 1
      %p105 = por %p103, %p104
      %p106 = scmp.ne.s32.totalorder %s97, %s98
      %p107 = scmp.eq.s32.totalorder %s24, 0
      %p108 = por %p106, %p107
      %p109 = scmp.ne.s32.totalorder %s97, %s98
      %p110 = scmp.eq.s32.totalorder %s25, 1
      %p111 = por %p109, %p110
      %p113 = scmp.ne.s32.totalorder %s98, %s112
      %p114 = scmp.eq.s32.totalorder %s25, 0
      %p115 = por %p113, %p114
      %s117 = sadd.s32 %s116, 1
      %p120 = scmp.eq.s32.totalorder %s19, 1
      %p121 = scmp.ne.s32.totalorder %s116, %s118
      %p122 = scmp.eq.s32.totalorder %s19, 0
      %p123 = por %p121, %p122
      %p124 = scmp.ne.s32.totalorder %s116, %s118
      %p125 = scmp.eq.s32.totalorder %s24, 1
      %p126 = por %p124, %p125
      %p127 = scmp.ne.s32.totalorder %s118, %s119
      %p128 = scmp.eq.s32.totalorder %s24, 0
      %p129 = por %p127, %p128
      %p130 = scmp.ne.s32.totalorder %s118, %s119
      %p131 = scmp.eq.s32.totalorder %s25, 1
      %p132 = por %p130, %p131
      %p134 = scmp.ne.s32.totalorder %s119, %s133
      %p135 = scmp.eq.s32.totalorder %s25, 0
      %p136 = por %p134, %p135
      %s138 = sadd.s32 %s137, 1
      %p141 = scmp.eq.s32.totalorder %s19, 1
      %p142 = scmp.ne.s32.totalorder %s137, %s139
      %p143 = scmp.eq.s32.totalorder %s19, 0
      %p144 = por %p142, %p143
      %p145 = scmp.ne.s32.totalorder %s137, %s139
      %p146 = scmp.eq.s32.totalorder %s24, 1
      %p147 = por %p145, %p146
      %p148 = scmp.ne.s32.totalorder %s139, %s140
      %p149 = scmp.eq.s32.totalorder %s24, 0
      %p150 = por %p148, %p149
      %p151 = scmp.ne.s32.totalorder %s139, %s140
      %p152 = scmp.eq.s32.totalorder %s25, 1
      %p153 = por %p151, %p152
      %p155 = scmp.ne.s32.totalorder %s140, %s154
      %p156 = scmp.eq.s32.totalorder %s25, 0
      %p157 = por %p155, %p156
      %s159 = sadd.s32 %s158, 1
      %p162 = scmp.eq.s32.totalorder %s19, 1
      %p163 = scmp.ne.s32.totalorder %s158, %s160
      %p164 = scmp.eq.s32.totalorder %s19, 0
      %p165 = por %p163, %p164
      %p166 = scmp.ne.s32.totalorder %s158, %s160
      %p167 = scmp.eq.s32.totalorder %s24, 1
      %p168 = por %p166, %p167
      %p169 = scmp.ne.s32.totalorder %s160, %s161
      %p170 = scmp.eq.s32.totalorder %s24, 0
      %p171 = por %p169, %p170
      %p172 = scmp.ne.s32.totalorder %s160, %s161
      %p173 = scmp.eq.s32.totalorder %s25, 1
      %p174 = por %p172, %p173
      %p176 = scmp.ne.s32.totalorder %s161, %s175
      %p177 = scmp.eq.s32.totalorder %s25, 0
      %p178 = por %p176, %p177
      %s179 = ssub.s32 %s19, %s26
      %p180 = scmp.eq.s32.totalorder %s179, 0
      %s182 = sadd.s32 %s181, 1
      %s183 = scalar_select %p180, %s181, %s182
      %p186 = pneg %p180
      %p187 = scmp.eq.s32.totalorder %s19, 1
      %p188 = por %p186, %p187
      %p189 = scmp.ne.s32.totalorder %s181, %s184
      %p190 = scmp.eq.s32.totalorder %s19, 0
      %p191 = por %p189, %p190
      %p192 = scmp.ne.s32.totalorder %s181, %s184
      %p193 = scmp.eq.s32.totalorder %s24, 1
      %p194 = por %p192, %p193
      %p195 = scmp.ne.s32.totalorder %s184, %s185
      %p196 = scmp.eq.s32.totalorder %s24, 0
      %p197 = por %p195, %p196
      %p198 = scmp.ne.s32.totalorder %s184, %s185
      %p199 = scmp.eq.s32.totalorder %s25, 1
      %p200 = por %p198, %p199
      %p202 = scmp.ne.s32.totalorder %s185, %s201
      %p203 = scmp.eq.s32.totalorder %s25, 0
      %p204 = por %p202, %p203
      %p205 = scmp.le.s32.totalorder 1, %s19
      %p206 = scmp.lt.s32.totalorder %s19, 3
      %p207 = pnand %p205, %p206
      %p208 = pneg %p207
      // Predicated region
      $region9: #{tpu_custom_call.1} parent=5 // pred_check
        _
      $region10: #{tpu_custom_call.1} parent=5 // pred_check_branch
        %210 = sbr.rel (%p207) target = $region12
      $region11: #{tpu_custom_call.1} parent=5 // pred_region
        %s211 = ssub.s32 %s19, 1
        // Predicated region
        $region13: #{tpu_custom_call.1} parent=11 // pred_check
          %p212 = pneg %p66
        $region14: #{tpu_custom_call.1} parent=11 // pred_check_branch
          %214 = sbr.rel (%p212) target = $region16
        $region15: #{tpu_custom_call.1} parent=11 // pred_region
          _
        $region16: #{tpu_custom_call.1} parent=11 // pred_fallthru
          _
        // Predicated region
        $region17: #{tpu_custom_call.1} parent=11 // pred_check
          %p215 = pneg %p87
        $region18: #{tpu_custom_call.1} parent=11 // pred_check_branch
          %217 = sbr.rel (%p215) target = $region20
        $region19: #{tpu_custom_call.1} parent=11 // pred_region
          _
        $region20: #{tpu_custom_call.1} parent=11 // pred_fallthru
          _
        // Predicated region
        $region21: #{tpu_custom_call.1} parent=11 // pred_check
          %p218 = pneg %p108
        $region22: #{tpu_custom_call.1} parent=11 // pred_check_branch
          %220 = sbr.rel (%p218) target = $region24
        $region23: #{tpu_custom_call.1} parent=11 // pred_region
          _
        $region24: #{tpu_custom_call.1} parent=11 // pred_fallthru
          _
        // Predicated region
        $region25: #{tpu_custom_call.1} parent=11 // pred_check
          %p221 = pneg %p129
        $region26: #{tpu_custom_call.1} parent=11 // pred_check_branch
          %223 = sbr.rel (%p221) target = $region28
        $region27: #{tpu_custom_call.1} parent=11 // pred_region
          _
        $region28: #{tpu_custom_call.1} parent=11 // pred_fallthru
          _
        // Predicated region
        $region29: #{tpu_custom_call.1} parent=11 // pred_check
          %p224 = pneg %p150
        $region30: #{tpu_custom_call.1} parent=11 // pred_check_branch
          %226 = sbr.rel (%p224) target = $region32
        $region31: #{tpu_custom_call.1} parent=11 // pred_region
          _
        $region32: #{tpu_custom_call.1} parent=11 // pred_fallthru
          _
        // Predicated region
        $region33: #{tpu_custom_call.1} parent=11 // pred_check
          %p227 = pneg %p171
        $region34: #{tpu_custom_call.1} parent=11 // pred_check_branch
          %229 = sbr.rel (%p227) target = $region36
        $region35: #{tpu_custom_call.1} parent=11 // pred_region
          _
        $region36: #{tpu_custom_call.1} parent=11 // pred_fallthru
          _
      $region12: #{tpu_custom_call.1} parent=5 // pred_fallthru
        _
      %p230 = scmp.lt.s32.totalorder %s19, 2
      // Predicated region
      $region37: #{tpu_custom_call.1} parent=5 // pred_check
        %p231 = pneg %p230
      $region38: #{tpu_custom_call.1} parent=5 // pred_check_branch
        %233 = sbr.rel (%p231) target = $region40
      $region39: #{tpu_custom_call.1} parent=5 // pred_region
        // Predicated region
        $region41: #{tpu_custom_call.1} parent=39 // pred_check
          %p234 = pneg %p39
        $region42: #{tpu_custom_call.1} parent=39 // pred_check_branch
          %236 = sbr.rel (%p234) target = $region44
        $region43: #{tpu_custom_call.1} parent=39 // pred_region
          %s237 = sand.u32 %s29, 1
          %s238 = scalar_lea.sflag [#allocation3], %s237
          %s239 = sand.u32 %s29, 1
          %s240 = smul.addr %s239, 16
          %s241 = scalar_lea.vmem [#allocation2], %s240
          %s243 = ssub.s32 256, 256
          %244 = vsyncadd %s238, %s243
          %s245 = smul.addr %s19, 2
          %s246 = smul.addr %s245, 128
          %s247 = scalar_lea.hbm %s0, %s246
          %s249 = sshll.u32 %s241, 4
          %s250 = int_to_ptr.vmem [resolvable:$true] %s249
          %252 = dma.hbm_to_vmem [thread:$0]  %s247, 256, %s250, %s238
        $region44: #{tpu_custom_call.1} parent=39 // pred_fallthru
          _
      $region40: #{tpu_custom_call.1} parent=5 // pred_fallthru
        _
      %p253 = scmp.le.s32.totalorder 1, %s19
      %p254 = scmp.lt.s32.totalorder %s19, 3
      %p255 = pnand %p253, %p254
      %p256 = pneg %p255
      // Predicated region
      $region45: #{tpu_custom_call.1} parent=5 // pred_check
        _
      $region46: #{tpu_custom_call.1} parent=5 // pred_check_branch
        %258 = sbr.rel (%p255) target = $region48
      $region47: #{tpu_custom_call.1} parent=5 // pred_region
        %s259 = ssub.s32 %s19, 1
        %s260 = sand.u32 %s32, 1
        %s261 = scalar_lea.sflag [#allocation3], %s260
        %s262 = sand.u32 %s32, 1
        %s263 = smul.addr %s262, 16
        %s264 = scalar_lea.vmem [#allocation2], %s263
        // Predicated region
        $region49: #{tpu_custom_call.1} parent=47 // pred_check
          %p265 = pneg %p45
        $region50: #{tpu_custom_call.1} parent=47 // pred_check_branch
          %267 = sbr.rel (%p265) target = $region52
        $region51: #{tpu_custom_call.1} parent=47 // pred_region
          %268 = dma.done %s261, 256
        $region52: #{tpu_custom_call.1} parent=47 // pred_fallthru
          _
        %s269 = sand.u32 %s32, 1
        %s270 = scalar_lea.sflag [#allocation3], %s269
        %s271 = sand.u32 %s32, 1
        %s272 = smul.addr %s271, 16
        %s273 = scalar_lea.vmem [#allocation2], %s272
        %p274 = pneg %p45
        %p275 = pneg %p42
        %p276 = pneg %p66
        %p277 = pneg %p63
        %p278 = pneg %p87
        %p279 = pneg %p84
        %p280 = pneg %p108
        %p281 = pneg %p105
        %p282 = pneg %p129
        %p283 = pneg %p126
        %p284 = pneg %p150
        %p285 = pneg %p147
        %p286 = pneg %p171
        %p287 = pneg %p168
        %p288 = pneg %p197
        %p289 = pneg %p194
        %s290 = sand.u32 %s184, 1
        %s291 = scalar_lea.sflag [#allocation4], %s290
        %s292 = sand.u32 %s184, 1
        %s293 = smul.addr %s292, 16
        %s294 = scalar_lea.vmem [#allocation5], %s293
        %v295 = vld [vmem:[%s264] sm:$0xf0]
        %v296 = vld [vmem:[%s264 + $0x8] sm:$0xf0]
        %v297 = vld [vmem:[%s1] sm:$0xf]
        %299 = vset.pattern.permute.xlu0 0
        %300 = vperm.xlu0 %299, %v297
        %v301 = vpop.permute.xlu0 %300
        %v303 = vlaneseq
        %v304 = vshrl.u32 %v303, 7
        %v305 = vsub.s32 4, %v304
        %v306 = vrot.slane %v295, %v305
        %v307 = vlaneseq
        %v308 = vshrl.u32 %v307, 7
        %v309 = vsub.s32 4, %v308
        %v310 = vrot.slane %v296, %v309
        %v311 = vmul.f32 %v301, %v306
        %v312 = vmul.f32 %v301, %v310
        %v313 = vadd.f32 %v311, 0.0
        %v314 = vadd.f32 %v312, 0.0
        %315 = vset.pattern.permute.xlu0 1
        %316 = vperm.xlu0 %315, %v297
        %v317 = vpop.permute.xlu0 %316
        %v319 = vlaneseq
        %v320 = vshrl.u32 %v319, 7
        %v321 = vsub.s32 5, %v320
        %v322 = vrot.slane %v295, %v321
        %v323 = vlaneseq
        %v324 = vshrl.u32 %v323, 7
        %v325 = vsub.s32 5, %v324
        %v326 = vrot.slane %v296, %v325
        %v327 = vmul.f32 %v317, %v322
        %v328 = vmul.f32 %v317, %v326
        %v329 = vadd.f32 %v313, %v327
        %v330 = vadd.f32 %v314, %v328
        %331 = vset.pattern.permute.xlu0 2
        %332 = vperm.xlu0 %331, %v297
        %v333 = vpop.permute.xlu0 %332
        %v335 = vlaneseq
        %v336 = vshrl.u32 %v335, 7
        %v337 = vsub.s32 6, %v336
        %v338 = vrot.slane %v295, %v337
        %v339 = vlaneseq
        %v340 = vshrl.u32 %v339, 7
        %v341 = vsub.s32 6, %v340
        %v342 = vrot.slane %v296, %v341
        %v343 = vmul.f32 %v333, %v338
        %v344 = vmul.f32 %v333, %v342
        %v345 = vadd.f32 %v329, %v343
        %v346 = vadd.f32 %v330, %v344
        %347 = vset.pattern.permute.xlu0 3
        %348 = vperm.xlu0 %347, %v297
        %v349 = vpop.permute.xlu0 %348
        %v351 = vlaneseq
        %v352 = vshrl.u32 %v351, 7
        %v353 = vsub.s32 7, %v352
        %v354 = vrot.slane %v295, %v353
        %v355 = vlaneseq
        %v356 = vshrl.u32 %v355, 7
        %v357 = vsub.s32 7, %v356
        %v358 = vrot.slane %v296, %v357
        %v359 = vmul.f32 %v349, %v354
        %v360 = vmul.f32 %v349, %v358
        %v361 = vadd.f32 %v345, %v359
        %v362 = vadd.f32 %v346, %v360
        %v363 = vld [vmem:[%s2] sm:$0xf]
        %365 = vset.pattern.permute.xlu0 0
        %366 = vperm.xlu0 %365, %v363
        %v367 = vpop.permute.xlu0 %366
        %v369 = vadd.f32 %v361, %v367
        %v370 = vadd.f32 %v362, %v367
        %v371 = vmax.f32 %v369, 0.0
        %v372 = vmax.f32 %v370, 0.0
        %v373 = vlaneseq
        %v374 = vand.u32 %v373, 127
        %v375 = vadd.s32 %v374, 128
        %v376 = vand.u32 %v374, 15
        %v377 = vand.u32 %v375, 15
        %vm378 = vcmp.lt.s32.totalorder %v376, 15
        %vm379 = vcmp.lt.s32.totalorder %v377, 15
        %v380 = vsel %vm378, %v371, 0.0
        %v381 = vsel %vm379, %v372, 0.0
        %vm382 = vcmp.gt.s32.totalorder %v376, 0
        %vm383 = vcmp.gt.s32.totalorder %v377, 0
        %v384 = vsel %vm382, %v371, 0.0
        %v385 = vsel %vm383, %v372, 0.0
        %388 = vrot.lane.b32.xlu0 %v380, 17
        %v389 = vpop.permute.xlu0 %388
        %390 = vrot.lane.b32.xlu0 %v381, 17
        %v391 = vpop.permute.xlu0 %390
        %vm392 = vcmask 138240
        %v393 = vsel %vm392, %v389, %v391
        %v396 = vsel %vm392, 0.0, %v389
        %v397 = vld [vmem:[%s3] sm:$0xf]
        %399 = vset.pattern.permute.xlu0 0
        %400 = vperm.xlu0 %399, %v397
        %v401 = vpop.permute.xlu0 %400
        %v403 = vmul.f32 %v396, %v401
        %v404 = vmul.f32 %v393, %v401
        %v405 = vadd.f32 %v403, 0.0
        %v406 = vadd.f32 %v404, 0.0
        %409 = vrot.lane.b32.xlu0 %v371, 16
        %v410 = vpop.permute.xlu0 %409
        %411 = vrot.lane.b32.xlu0 %v372, 16
        %v412 = vpop.permute.xlu0 %411
        %vm413 = vcmask 130048
        %v414 = vsel %vm413, %v410, %v412
        %v417 = vsel %vm413, 0.0, %v410
        %418 = vset.pattern.permute.xlu0 1
        %419 = vperm.xlu0 %418, %v397
        %v420 = vpop.permute.xlu0 %419
        %v422 = vmul.f32 %v417, %v420
        %v423 = vmul.f32 %v414, %v420
        %v424 = vadd.f32 %v405, %v422
        %v425 = vadd.f32 %v406, %v423
        %428 = vrot.lane.b32.xlu0 %v384, 15
        %v429 = vpop.permute.xlu0 %428
        %430 = vrot.lane.b32.xlu0 %v385, 15
        %v431 = vpop.permute.xlu0 %430
        %vm432 = vcmask 121856
        %v433 = vsel %vm432, %v429, %v431
        %v436 = vsel %vm432, 0.0, %v429
        %437 = vset.pattern.permute.xlu0 2
        %438 = vperm.xlu0 %437, %v397
        %v439 = vpop.permute.xlu0 %438
        %v441 = vmul.f32 %v436, %v439
        %v442 = vmul.f32 %v433, %v439
        %v443 = vadd.f32 %v424, %v441
        %v444 = vadd.f32 %v425, %v442
        %445 = vrot.lane.b32.xlu0 %v380, 1
        %v446 = vpop.permute.xlu0 %445
        %447 = vrot.lane.b32.xlu0 %v381, 1
        %v448 = vpop.permute.xlu0 %447
        %vm449 = vcmask 7168
        %v450 = vsel %vm449, %v446, %v448
        %v453 = vsel %vm449, 0.0, %v446
        %454 = vset.pattern.permute.xlu0 3
        %455 = vperm.xlu0 %454, %v397
        %v456 = vpop.permute.xlu0 %455
        %v458 = vmul.f32 %v453, %v456
        %v459 = vmul.f32 %v450, %v456
        %v460 = vadd.f32 %v443, %v458
        %v461 = vadd.f32 %v444, %v459
        %462 = vset.pattern.permute.xlu0 4
        %463 = vperm.xlu0 %462, %v397
        %v464 = vpop.permute.xlu0 %463
        %v466 = vmul.f32 %v371, %v464
        %v467 = vmul.f32 %v372, %v464
        %v468 = vadd.f32 %v460, %v466
        %v469 = vadd.f32 %v461, %v467
        %470 = vrot.lane.b32.xlu0 %v384, 127
        %v471 = vpop.permute.xlu0 %470
        %472 = vrot.lane.b32.xlu0 %v385, 127
        %v473 = vpop.permute.xlu0 %472
        %vm474 = vcmask 1039360
        %v475 = vsel %vm474, %v471, %v473
        %v478 = vsel %vm474, %v473, 0.0
        %479 = vset.pattern.permute.xlu0 5
        %480 = vperm.xlu0 %479, %v397
        %v481 = vpop.permute.xlu0 %480
        %v483 = vmul.f32 %v475, %v481
        %v484 = vmul.f32 %v478, %v481
        %v485 = vadd.f32 %v468, %v483
        %v486 = vadd.f32 %v469, %v484
        %487 = vrot.lane.b32.xlu0 %v380, 113
        %v488 = vpop.permute.xlu0 %487
        %489 = vrot.lane.b32.xlu0 %v381, 113
        %v490 = vpop.permute.xlu0 %489
        %vm491 = vcmask 924672
        %v492 = vsel %vm491, %v488, %v490
        %v495 = vsel %vm491, %v490, 0.0
        %496 = vset.pattern.permute.xlu0 6
        %497 = vperm.xlu0 %496, %v397
        %v498 = vpop.permute.xlu0 %497
        %v500 = vmul.f32 %v492, %v498
        %v501 = vmul.f32 %v495, %v498
        %v502 = vadd.f32 %v485, %v500
        %v503 = vadd.f32 %v486, %v501
        %504 = vrot.lane.b32.xlu0 %v371, 112
        %v505 = vpop.permute.xlu0 %504
        %506 = vrot.lane.b32.xlu0 %v372, 112
        %v507 = vpop.permute.xlu0 %506
        %vm508 = vcmask 916480
        %v509 = vsel %vm508, %v505, %v507
        %v512 = vsel %vm508, %v507, 0.0
        %513 = vset.pattern.permute.xlu0 7
        %514 = vperm.xlu0 %513, %v397
        %v515 = vpop.permute.xlu0 %514
        %v517 = vmul.f32 %v509, %v515
        %v518 = vmul.f32 %v512, %v515
        %v519 = vadd.f32 %v502, %v517
        %v520 = vadd.f32 %v503, %v518
        %521 = vrot.lane.b32.xlu0 %v384, 111
        %v522 = vpop.permute.xlu0 %521
        %523 = vrot.lane.b32.xlu0 %v385, 111
        %v524 = vpop.permute.xlu0 %523
        %vm525 = vcmask 908288
        %v526 = vsel %vm525, %v522, %v524
        %v529 = vsel %vm525, %v524, 0.0
        %530 = vset.pattern.permute.xlu0 8
        %531 = vperm.xlu0 %530, %v397
        %v532 = vpop.permute.xlu0 %531
        %v534 = vmul.f32 %v526, %v532
        %v535 = vmul.f32 %v529, %v532
        %v536 = vadd.f32 %v519, %v534
        %v537 = vadd.f32 %v520, %v535
        %v538 = vld [vmem:[%s4] sm:$0xf]
        %540 = vset.pattern.permute.xlu0 0
        %541 = vperm.xlu0 %540, %v538
        %v542 = vpop.permute.xlu0 %541
        %v544 = vadd.f32 %v536, %v542
        %v545 = vadd.f32 %v537, %v542
        %v546 = vld [vmem:[%s5] sm:$0xf]
        %548 = vset.pattern.permute.xlu0 0
        %549 = vperm.xlu0 %548, %v546
        %v550 = vpop.permute.xlu0 %549
        %v552 = vlaneseq
        %v553 = vshrl.u32 %v552, 7
        %v554 = vsub.s32 0, %v553
        %v555 = vrot.slane %v544, %v554
        %v556 = vlaneseq
        %v557 = vshrl.u32 %v556, 7
        %v558 = vsub.s32 0, %v557
        %v559 = vrot.slane %v545, %v558
        %v560 = vmul.f32 %v550, %v555
        %v561 = vmul.f32 %v550, %v559
        %v562 = vadd.f32 %v560, 0.0
        %v563 = vadd.f32 %v561, 0.0
        %564 = vset.pattern.permute.xlu0 1
        %565 = vperm.xlu0 %564, %v546
        %v566 = vpop.permute.xlu0 %565
        %v568 = vlaneseq
        %v569 = vshrl.u32 %v568, 7
        %v570 = vsub.s32 1, %v569
        %v571 = vrot.slane %v544, %v570
        %v572 = vlaneseq
        %v573 = vshrl.u32 %v572, 7
        %v574 = vsub.s32 1, %v573
        %v575 = vrot.slane %v545, %v574
        %v576 = vmul.f32 %v566, %v571
        %v577 = vmul.f32 %v566, %v575
        %v578 = vadd.f32 %v562, %v576
        %v579 = vadd.f32 %v563, %v577
        %580 = vset.pattern.permute.xlu0 2
        %581 = vperm.xlu0 %580, %v546
        %v582 = vpop.permute.xlu0 %581
        %v584 = vlaneseq
        %v585 = vshrl.u32 %v584, 7
        %v586 = vsub.s32 2, %v585
        %v587 = vrot.slane %v544, %v586
        %v588 = vlaneseq
        %v589 = vshrl.u32 %v588, 7
        %v590 = vsub.s32 2, %v589
        %v591 = vrot.slane %v545, %v590
        %v592 = vmul.f32 %v582, %v587
        %v593 = vmul.f32 %v582, %v591
        %v594 = vadd.f32 %v578, %v592
        %v595 = vadd.f32 %v579, %v593
        %596 = vset.pattern.permute.xlu0 3
        %597 = vperm.xlu0 %596, %v546
        %v598 = vpop.permute.xlu0 %597
        %v600 = vlaneseq
        %v601 = vshrl.u32 %v600, 7
        %v602 = vsub.s32 3, %v601
        %v603 = vrot.slane %v544, %v602
        %v604 = vlaneseq
        %v605 = vshrl.u32 %v604, 7
        %v606 = vsub.s32 3, %v605
        %v607 = vrot.slane %v545, %v606
        %v608 = vmul.f32 %v598, %v603
        %v609 = vmul.f32 %v598, %v607
        %v610 = vadd.f32 %v594, %v608
        %v611 = vadd.f32 %v595, %v609
        %v612 = vld [vmem:[%s6] sm:$0xf]
        %614 = vset.pattern.permute.xlu0 0
        %615 = vperm.xlu0 %614, %v612
        %v616 = vpop.permute.xlu0 %615
        %v618 = vadd.f32 %v610, %v616
        %v619 = vadd.f32 %v611, %v616
        %v620 = vmax.f32 %v618, 0.0
        %v621 = vmax.f32 %v619, 0.0
        %v622 = vld [vmem:[%s264] sm:$0xf]
        %v623 = vld [vmem:[%s264 + $0x8] sm:$0xf]
        %v626 = vcombine.low %v622, %v623
        %628 = vst [vmem:[%s294] sm:$0xff] %v626
        %v631 = vcombine.low %v620, %v621
        %633 = vst [vmem:[%s294 + $0x8] sm:$0xff] %v631
        %s634 = sand.u32 %s184, 1
        %s635 = scalar_lea.sflag [#allocation4], %s634
        %s636 = sand.u32 %s184, 1
        %s637 = smul.addr %s636, 16
        %s638 = scalar_lea.vmem [#allocation5], %s637
        // Predicated region
        $region53: #{tpu_custom_call.1} parent=47 // pred_check
          %p639 = pneg %p194
        $region54: #{tpu_custom_call.1} parent=47 // pred_check_branch
          %641 = sbr.rel (%p639) target = $region56
        $region55: #{tpu_custom_call.1} parent=47 // pred_region
          %s643 = ssub.s32 256, 256
          %644 = vsyncadd %s635, %s643
          %s645 = smul.addr %s24, 4
          %s646 = smul.addr %s645, 64
          %s647 = scalar_lea.hbm %s7, %s646
          %s649 = sshll.u32 %s638, 4
          %s650 = int_to_ptr.vmem [resolvable:$true] %s649
          %652 = dma.vmem_to_hbm [thread:$0]  %s650, 256, %s647, %s635
        $region56: #{tpu_custom_call.1} parent=47 // pred_fallthru
          _
      $region48: #{tpu_custom_call.1} parent=5 // pred_fallthru
        _
      %p653 = scmp.le.s32.totalorder 2, %s19
      // Predicated region
      $region57: #{tpu_custom_call.1} parent=5 // pred_check
        %p654 = pneg %p653
      $region58: #{tpu_custom_call.1} parent=5 // pred_check_branch
        %656 = sbr.rel (%p654) target = $region60
      $region59: #{tpu_custom_call.1} parent=5 // pred_region
        %s657 = ssub.s32 %s19, 2
        // Predicated region
        $region61: #{tpu_custom_call.1} parent=59 // pred_check
          %p658 = pneg %p200
        $region62: #{tpu_custom_call.1} parent=59 // pred_check_branch
          %660 = sbr.rel (%p658) target = $region64
        $region63: #{tpu_custom_call.1} parent=59 // pred_region
          %s661 = sand.u32 %s185, 1
          %s662 = scalar_lea.sflag [#allocation4], %s661
          %s663 = sand.u32 %s185, 1
          %s664 = smul.addr %s663, 16
          %s665 = scalar_lea.vmem [#allocation5], %s664
          %666 = dma.done %s662, 256
        $region64: #{tpu_custom_call.1} parent=59 // pred_fallthru
          _
      $region60: #{tpu_custom_call.1} parent=5 // pred_fallthru
        _
    $region6: #{tpu_custom_call.1} parent=1 // loop_footer
      %s23 = sadd.s32 1, %s19
    $region7: #{tpu_custom_call.1} parent=1 // loop_footer_branch
      %18 = sbr.rel target = $region3
    $region8: #{tpu_custom_call.1} parent=1 // loop_exit
      _
    %667 = vsyncpa [#allocation3], 1
    %s668 = scalar_lea.sflag [#allocation3], 1
    %669 = vsyncpa %s668, 1
    %670 = vsyncpa [#allocation4], 1
    %s671 = scalar_lea.sflag [#allocation4], 1
    %672 = vsyncpa %s671, 1

</llo_original>
